<compile_context>
chip_gen: v6e
topology: v6e:2x2x1
jax: 0.10.0
libtpu: 0.0.40
codegen_flags: <defaults>
</compile_context>

<pallas_src>
import jax
import jax.numpy as jnp
from jax.experimental import pallas as pl
from jax.experimental.pallas import tpu as pltpu

# Sobel kernels from the module's __init__ (sobel_y = sobel_x.T).
SOBEL_X = ((1.0, 2.0, 1.0),
           (0.0, 0.0, 0.0),
           (-1.0, -2.0, -1.0))
SOBEL_Y = tuple(zip(*SOBEL_X))


def _round_up(x, m):
    return (x + m - 1) // m * m


def _cdiv(a, b):
    return (a + b - 1) // b


def _vmem_capacity_bytes():
    try:
        return int(pltpu.get_tpu_info().vmem_capacity_bytes)
    except Exception:
        return 64 << 20  # conservative (v7x-sized) default


def _choose_tiles(B, H, W, sub, target_f32_bytes, min_steps=4):
    """Pick (batch_tile TB, row_tile TH); TH is a multiple of `sub`."""
    Wpad = _round_up(W, 128)          # lane-padded width of VMEM temporaries
    row_bytes = Wpad * 4              # one f32 row in VMEM
    max_rows = max(sub, (target_f32_bytes // row_bytes) // sub * sub)
    TH = min(_round_up(H, sub), max_rows)
    TB = max(1, min(B, target_f32_bytes // max(1, TH * row_bytes)))

    def steps(tb, th):
        return _cdiv(B, tb) * _cdiv(H, th)

    # >= 4 grid steps when possible: both v7x TensorCores get >= 2 iterations
    # each, preserving double-buffering on every core.
    while steps(TB, TH) < min_steps and TH > sub:
        TH = max(sub, ((TH // 2) // sub) * sub)
    while steps(TB, TH) < min_steps and TB > 1:
        TB = max(1, TB // 2)
    return TB, TH


def _make_sobel_kernel(H, TH, sub, mask_rows):
    def kernel(top_ref, main_ref, bot_ref, out_ref):
        s = pl.program_id(1)
        row0 = s * TH
        W = main_ref.shape[2]

        x = main_ref[...].astype(jnp.float32)                  # (TB, TH, W)
        if mask_rows:
            # Last strip only partially covers H: zero the out-of-range rows so
            # they behave like the conv's zero 'same' padding (Pallas edge-block
            # reads are otherwise garbage).
            rows = jax.lax.broadcasted_iota(jnp.int32, x.shape, 1)
            x = jnp.where(rows + row0 < H, x, 0.0)

        # Halo rows (slice *before* upcast).  Out-of-image rows -> zeros.
        top = top_ref[:, sub - 1:sub, :].astype(jnp.float32)    # row row0 - 1
        bot = bot_ref[:, 0:1, :].astype(jnp.float32)            # row row0 + TH
        top = jnp.where(s > 0, top, 0.0)
        bot = jnp.where(row0 + TH < H, bot, 0.0)

        def hpass(v):
            # Horizontal [1,2,1] smooth and [1,0,-1] diff with zero columns at
            # the image border.  One small lane concat per call; the DMA'd
            # blocks themselves stay exactly W wide / lane aligned.
            z = jnp.zeros(v.shape[:-1] + (1,), jnp.float32)
            ve = jnp.concatenate([z, v, z], axis=-1)            # (.., W + 2)
            left = ve[..., 0:W]
            right = ve[..., 2:W + 2]
            return left + (v + v) + right, left - right

        sm, df = hpass(x)            # (TB, TH, W)
        sm_t, df_t = hpass(top)      # (TB, 1,  W)
        sm_b, df_b = hpass(bot)      # (TB, 1,  W)

        # Vertical combine, reusing the per-row horizontal passes:
        #   gx[r] = smooth[r-1] - smooth[r+1]
        #   gy[r] = diff[r-1] + 2*diff[r] + diff[r+1]
        # Interior rows [1, TH-2] come straight from sublane slices of sm/df
        # (no (TH+2)-row concatenated temporaries); the two strip-boundary rows
        # are fixed up with 1-row computations and partial sublane stores.
        gx = sm[:, 0:TH - 2, :] - sm[:, 2:TH, :]
        dmid = df[:, 1:TH - 1, :]
        gy = df[:, 0:TH - 2, :] + (dmid + dmid) + df[:, 2:TH, :]
        out_ref[:, 1:TH - 1, :] = jnp.sqrt(gx * gx + gy * gy)

        # First row of the strip: above = top halo, below = row 1.
        gx0 = sm_t - sm[:, 1:2, :]
        d0 = df[:, 0:1, :]
        gy0 = df_t + (d0 + d0) + df[:, 1:2, :]
        out_ref[:, 0:1, :] = jnp.sqrt(gx0 * gx0 + gy0 * gy0)

        # Last row of the strip: above = row TH-2, below = bottom halo.
        # NOTE: sqrt has an undefined gradient at gx=gy=0; forward pass is fine.
        gxl = sm[:, TH - 2:TH - 1, :] - sm_b
        dl = df[:, TH - 1:TH, :]
        gyl = df[:, TH - 2:TH - 1, :] + (dl + dl) + df_b
        out_ref[:, TH - 1:TH, :] = jnp.sqrt(gxl * gxl + gyl * gyl)

    return kernel


def gradient_layer(d, *, tile_h=None, tile_b=None):
    """Equivalent of GradientLayer.forward. d: (B, 1, H, W) -> (B, 1, H, W) f32."""
    B, C, H, W = d.shape
    assert C == 1, "GradientLayer operates on single-channel inputs"

    # Module does d.float(); bf16 inputs stay narrow in HBM (upcast in VMEM),
    # everything else is read as f32.  Output is always f32.
    load_dtype = jnp.bfloat16 if d.dtype == jnp.bfloat16 else jnp.float32
    x = d.reshape(B, H, W).astype(load_dtype)
    itemsize = jnp.dtype(load_dtype).itemsize
    sub = 8 if itemsize == 4 else 16      # sublane tile (packed dtypes: 16)

    vmem_cap = _vmem_capacity_bytes()
    # Smaller strips on 64 MiB-VMEM parts (v7x), larger on 128 MiB (v5e/v6e):
    # the in-kernel f32 temporaries are a handful of strip-sized arrays, so the
    # strip size — not the pipeline buffers — sets peak VMEM.
    target_strip_f32 = (3 << 20) // 2 if vmem_cap <= (64 << 20) else (4 << 20)

    TB, TH = _choose_tiles(B, H, W, sub, target_strip_f32)
    if tile_h is not None:
        TH = max(sub, _round_up(int(tile_h), sub))
    if tile_b is not None:
        TB = max(1, min(B, int(tile_b)))

    nb, ns = _cdiv(B, TB), _cdiv(H, TH)
    hb = TH // sub                        # halo-block stride along H
    n_hblk = _cdiv(H, sub)                # number of sub-row blocks covering H
    mask_rows = (H % TH) != 0             # last strip is ragged -> mask reads

    kernel = _make_sobel_kernel(H, TH, sub, mask_rows)

    # VMEM budget: double-buffered pipeline blocks plus ~8 strip-sized f32
    # temporaries inside the body (upcast, shifted copies, sm/df, gx/gy, ...).
    Wpad = _round_up(W, 128)
    strip_f32 = TB * TH * Wpad * 4
    pipeline = 2 * (TB * TH * Wpad * itemsize          # main input block
                    + 2 * TB * sub * Wpad * itemsize   # two halo blocks
                    + strip_f32)                       # output block
    budget = pipeline + 8 * strip_f32 + (6 << 20)
    vmem_limit = int(min(max(budget, 32 << 20), vmem_cap - (8 << 20)))

    n_elem = B * H * W
    cost = pl.CostEstimate(flops=12 * n_elem,
                           transcendentals=n_elem,
                           bytes_accessed=n_elem * (itemsize + 4))

    out = pl.pallas_call(
        kernel,
        out_shape=jax.ShapeDtypeStruct((B, H, W), jnp.float32),
        grid_spec=pltpu.PrefetchScalarGridSpec(
            num_scalar_prefetch=0,
            grid=(nb, ns),
            in_specs=[
                # Sublane tile holding the row just above the strip (clamped at
                # the top edge; the kernel substitutes zeros when s == 0).
                pl.BlockSpec((TB, sub, W),
                             lambda b, s: (b, jnp.maximum(s * hb - 1, 0), 0)),
                # The strip itself.
                pl.BlockSpec((TB, TH, W), lambda b, s: (b, s, 0)),
                # Sublane tile holding the row just below the strip (clamped at
                # the bottom edge; the kernel substitutes zeros when OOB).
                pl.BlockSpec((TB, sub, W),
                             lambda b, s: (b, jnp.minimum((s + 1) * hb,
                                                          n_hblk - 1), 0)),
            ],
            out_specs=pl.BlockSpec((TB, TH, W), lambda b, s: (b, s, 0)),
        ),
        compiler_params=pltpu.CompilerParams(
            dimension_semantics=("parallel", "parallel"),
            vmem_limit_bytes=vmem_limit),
        cost_estimate=cost,
    )(x, x, x)

    return out.reshape(B, 1, H, W)


def _reference(d):
    """Pure-JAX reference (lax.conv) for correctness checks."""
    d = d.astype(jnp.float32)
    wx = jnp.array(SOBEL_X, dtype=jnp.float32)[None, None]   # (1,1,3,3)
    wy = jnp.array(SOBEL_Y, dtype=jnp.float32)[None, None]
    dn = jax.lax.conv_dimension_numbers(d.shape, wx.shape, ("NCHW", "OIHW", "NCHW"))
    gx = jax.lax.conv_general_dilated(d, wx, (1, 1), "SAME", dimension_numbers=dn)
    gy = jax.lax.conv_general_dilated(d, wy, (1, 1), "SAME", dimension_numbers=dn)
    return jnp.sqrt(gx * gx + gy * gy)


if __name__ == "__main__":
    root = jax.random.PRNGKey(0)
    k1, k2, k3 = jax.random.split(root, 3)

    # 1) Canonical small shape (single-channel, as the module expects).
    B, C, H, W = 2, 1, 16, 16
    d = jax.random.normal(k1, (B, C, H, W), dtype=jnp.float32)
    out = gradient_layer(d)
    jax.block_until_ready(out)
    assert out.shape == (B, C, H, W) and out.dtype == jnp.float32
    assert jnp.allclose(out, _reference(d), atol=1e-4, rtol=1e-4)

    # 2) Ragged strips / ragged batch tile / in-kernel row masking.
    d2 = jax.random.normal(k2, (3, 1, 40, 24), dtype=jnp.float32)
    out2 = gradient_layer(d2, tile_h=16, tile_b=2)
    jax.block_until_ready(out2)
    assert jnp.allclose(out2, _reference(d2), atol=1e-4, rtol=1e-4)

    # 3) Lane-aligned width + multi-strip path chosen automatically.
    d3 = jax.random.normal(k3, (2, 1, 64, 128), dtype=jnp.float32)
    out3 = gradient_layer(d3)
    jax.block_until_ready(out3)
    assert jnp.allclose(out3, _reference(d3), atol=1e-4, rtol=1e-4)

    # 4) bf16-input path: narrow HBM reads, f32 compute/output.
    d4 = d.astype(jnp.bfloat16)
    out4 = gradient_layer(d4)
    jax.block_until_ready(out4)
    assert out4.dtype == jnp.float32
    assert jnp.allclose(out4, _reference(d4.astype(jnp.float32)),
                        atol=1e-3, rtol=1e-3)

    print("KERNEL_OK")
</pallas_src>

<mosaic_0001>
module attributes {stable_mosaic.version = 11 : i64} {
  func.func @kernel(%arg0: i32, %arg1: i32, %arg2: memref<1x8x16xf32, #tpu.memory_space<vmem>>, %arg3: memref<1x8x16xf32, #tpu.memory_space<vmem>>, %arg4: memref<1x8x16xf32, #tpu.memory_space<vmem>>, %arg5: memref<1x8x16xf32, #tpu.memory_space<vmem>>) attributes {dimension_semantics = [#tpu.dimension_semantics<parallel>, #tpu.dimension_semantics<parallel>], iteration_bounds = array<i64: 2, 2>, scalar_prefetch = 0 : i64, scratch_operands = 0 : i64, tpu.core_type = #tpu.core_type<tc>, window_params = [{transform_indices = @transform_0, window_bounds = array<i64: 1, 8, 16>}, {transform_indices = @transform_1, window_bounds = array<i64: 1, 8, 16>}, {transform_indices = @transform_2, window_bounds = array<i64: 1, 8, 16>}, {transform_indices = @transform_3, window_bounds = array<i64: 1, 8, 16>}]} {
    %c8_i32 = arith.constant 8 : i32
    %0 = arith.muli %arg1, %c8_i32 : i32
    %c0 = arith.constant 0 : index
    %c0_0 = arith.constant 0 : index
    %c0_1 = arith.constant 0 : index
    %1 = vector.load %arg3[%c0, %c0_0, %c0_1] : memref<1x8x16xf32, #tpu.memory_space<vmem>>, vector<1x8x16xf32>
    %c0_2 = arith.constant 0 : index
    %c7 = arith.constant 7 : index
    %c0_3 = arith.constant 0 : index
    %2 = vector.load %arg2[%c0_2, %c7, %c0_3] : memref<1x8x16xf32, #tpu.memory_space<vmem>>, vector<1x1x16xf32>
    %c0_4 = arith.constant 0 : index
    %c0_5 = arith.constant 0 : index
    %c0_6 = arith.constant 0 : index
    %3 = vector.load %arg4[%c0_4, %c0_5, %c0_6] : memref<1x8x16xf32, #tpu.memory_space<vmem>>, vector<1x1x16xf32>
    %c0_i32 = arith.constant 0 : i32
    %4 = arith.cmpi sgt, %arg1, %c0_i32 : i32
    %cst = arith.constant 0.000000e+00 : f32
    %5 = vector.broadcast %cst : f32 to vector<1x1x16xf32>
    %6 = arith.select %4, %2, %5 : vector<1x1x16xf32>
    %c8_i32_7 = arith.constant 8 : i32
    %7 = arith.addi %0, %c8_i32_7 : i32
    %c16_i32 = arith.constant 16 : i32
    %8 = arith.cmpi slt, %7, %c16_i32 : i32
    %cst_8 = arith.constant 0.000000e+00 : f32
    %9 = vector.broadcast %cst_8 : f32 to vector<1x1x16xf32>
    %10 = arith.select %8, %3, %9 : vector<1x1x16xf32>
    %cst_9 = arith.constant 0.000000e+00 : f32
    %11 = vector.broadcast %cst_9 : f32 to vector<1x8x1xf32>
    %12 = tpu.concatenate %11, %1, %11 in 2 : vector<1x8x1xf32>, vector<1x8x16xf32>, vector<1x8x1xf32> -> vector<1x8x18xf32>
    %13 = vector.extract_strided_slice %12 {offsets = [0, 0, 0], sizes = [1, 8, 16], strides = [1, 1, 1]} : vector<1x8x18xf32> to vector<1x8x16xf32>
    %14 = vector.extract_strided_slice %12 {offsets = [0, 0, 2], sizes = [1, 8, 16], strides = [1, 1, 1]} : vector<1x8x18xf32> to vector<1x8x16xf32>
    %15 = arith.addf %1, %1 : vector<1x8x16xf32>
    %16 = arith.addf %13, %15 : vector<1x8x16xf32>
    %17 = arith.addf %16, %14 : vector<1x8x16xf32>
    %18 = arith.subf %13, %14 : vector<1x8x16xf32>
    %cst_10 = arith.constant 0.000000e+00 : f32
    %19 = vector.broadcast %cst_10 : f32 to vector<1x1x1xf32>
    %20 = tpu.concatenate %19, %6, %19 in 2 : vector<1x1x1xf32>, vector<1x1x16xf32>, vector<1x1x1xf32> -> vector<1x1x18xf32>
    %21 = vector.extract_strided_slice %20 {offsets = [0, 0, 0], sizes = [1, 1, 16], strides = [1, 1, 1]} : vector<1x1x18xf32> to vector<1x1x16xf32>
    %22 = vector.extract_strided_slice %20 {offsets = [0, 0, 2], sizes = [1, 1, 16], strides = [1, 1, 1]} : vector<1x1x18xf32> to vector<1x1x16xf32>
    %23 = arith.addf %6, %6 : vector<1x1x16xf32>
    %24 = arith.addf %21, %23 : vector<1x1x16xf32>
    %25 = arith.addf %24, %22 : vector<1x1x16xf32>
    %26 = arith.subf %21, %22 : vector<1x1x16xf32>
    %cst_11 = arith.constant 0.000000e+00 : f32
    %27 = vector.broadcast %cst_11 : f32 to vector<1x1x1xf32>
    %28 = tpu.concatenate %27, %10, %27 in 2 : vector<1x1x1xf32>, vector<1x1x16xf32>, vector<1x1x1xf32> -> vector<1x1x18xf32>
    %29 = vector.extract_strided_slice %28 {offsets = [0, 0, 0], sizes = [1, 1, 16], strides = [1, 1, 1]} : vector<1x1x18xf32> to vector<1x1x16xf32>
    %30 = vector.extract_strided_slice %28 {offsets = [0, 0, 2], sizes = [1, 1, 16], strides = [1, 1, 1]} : vector<1x1x18xf32> to vector<1x1x16xf32>
    %31 = arith.addf %10, %10 : vector<1x1x16xf32>
    %32 = arith.addf %29, %31 : vector<1x1x16xf32>
    %33 = arith.addf %32, %30 : vector<1x1x16xf32>
    %34 = arith.subf %29, %30 : vector<1x1x16xf32>
    %35 = vector.extract_strided_slice %17 {offsets = [0, 0, 0], sizes = [1, 6, 16], strides = [1, 1, 1]} : vector<1x8x16xf32> to vector<1x6x16xf32>
    %36 = vector.extract_strided_slice %17 {offsets = [0, 2, 0], sizes = [1, 6, 16], strides = [1, 1, 1]} : vector<1x8x16xf32> to vector<1x6x16xf32>
    %37 = arith.subf %35, %36 : vector<1x6x16xf32>
    %38 = vector.extract_strided_slice %18 {offsets = [0, 1, 0], sizes = [1, 6, 16], strides = [1, 1, 1]} : vector<1x8x16xf32> to vector<1x6x16xf32>
    %39 = vector.extract_strided_slice %18 {offsets = [0, 0, 0], sizes = [1, 6, 16], strides = [1, 1, 1]} : vector<1x8x16xf32> to vector<1x6x16xf32>
    %40 = arith.addf %38, %38 : vector<1x6x16xf32>
    %41 = arith.addf %39, %40 : vector<1x6x16xf32>
    %42 = vector.extract_strided_slice %18 {offsets = [0, 2, 0], sizes = [1, 6, 16], strides = [1, 1, 1]} : vector<1x8x16xf32> to vector<1x6x16xf32>
    %43 = arith.addf %41, %42 : vector<1x6x16xf32>
    %44 = arith.mulf %37, %37 : vector<1x6x16xf32>
    %45 = arith.mulf %43, %43 : vector<1x6x16xf32>
    %46 = arith.addf %44, %45 : vector<1x6x16xf32>
    %47 = math.sqrt %46 : vector<1x6x16xf32>
    %c0_12 = arith.constant 0 : index
    %c1 = arith.constant 1 : index
    %c0_13 = arith.constant 0 : index
    %48 = vector.load %arg5[%c0_12, %c1, %c0_13] : memref<1x8x16xf32, #tpu.memory_space<vmem>>, vector<1x6x16xf32>
    tpu.vector_store %arg5[%c0_12, %c1, %c0_13], %47 {strides = array<i32>} : memref<1x8x16xf32, #tpu.memory_space<vmem>>, vector<1x6x16xf32>,
    %49 = vector.extract_strided_slice %17 {offsets = [0, 1, 0], sizes = [1, 1, 16], strides = [1, 1, 1]} : vector<1x8x16xf32> to vector<1x1x16xf32>
    %50 = arith.subf %25, %49 : vector<1x1x16xf32>
    %51 = vector.extract_strided_slice %18 {offsets = [0, 0, 0], sizes = [1, 1, 16], strides = [1, 1, 1]} : vector<1x8x16xf32> to vector<1x1x16xf32>
    %52 = arith.addf %51, %51 : vector<1x1x16xf32>
    %53 = arith.addf %26, %52 : vector<1x1x16xf32>
    %54 = vector.extract_strided_slice %18 {offsets = [0, 1, 0], sizes = [1, 1, 16], strides = [1, 1, 1]} : vector<1x8x16xf32> to vector<1x1x16xf32>
    %55 = arith.addf %53, %54 : vector<1x1x16xf32>
    %56 = arith.mulf %50, %50 : vector<1x1x16xf32>
    %57 = arith.mulf %55, %55 : vector<1x1x16xf32>
    %58 = arith.addf %56, %57 : vector<1x1x16xf32>
    %59 = math.sqrt %58 : vector<1x1x16xf32>
    %c0_14 = arith.constant 0 : index
    %c0_15 = arith.constant 0 : index
    %c0_16 = arith.constant 0 : index
    %60 = vector.load %arg5[%c0_14, %c0_15, %c0_16] : memref<1x8x16xf32, #tpu.memory_space<vmem>>, vector<1x1x16xf32>
    tpu.vector_store %arg5[%c0_14, %c0_15, %c0_16], %59 {strides = array<i32>} : memref<1x8x16xf32, #tpu.memory_space<vmem>>, vector<1x1x16xf32>,
    %61 = vector.extract_strided_slice %17 {offsets = [0, 6, 0], sizes = [1, 1, 16], strides = [1, 1, 1]} : vector<1x8x16xf32> to vector<1x1x16xf32>
    %62 = arith.subf %61, %33 : vector<1x1x16xf32>
    %63 = vector.extract_strided_slice %18 {offsets = [0, 7, 0], sizes = [1, 1, 16], strides = [1, 1, 1]} : vector<1x8x16xf32> to vector<1x1x16xf32>
    %64 = vector.extract_strided_slice %18 {offsets = [0, 6, 0], sizes = [1, 1, 16], strides = [1, 1, 1]} : vector<1x8x16xf32> to vector<1x1x16xf32>
    %65 = arith.addf %63, %63 : vector<1x1x16xf32>
    %66 = arith.addf %64, %65 : vector<1x1x16xf32>
    %67 = arith.addf %66, %34 : vector<1x1x16xf32>
    %68 = arith.mulf %62, %62 : vector<1x1x16xf32>
    %69 = arith.mulf %67, %67 : vector<1x1x16xf32>
    %70 = arith.addf %68, %69 : vector<1x1x16xf32>
    %71 = math.sqrt %70 : vector<1x1x16xf32>
    %c0_17 = arith.constant 0 : index
    %c7_18 = arith.constant 7 : index
    %c0_19 = arith.constant 0 : index
    %72 = vector.load %arg5[%c0_17, %c7_18, %c0_19] : memref<1x8x16xf32, #tpu.memory_space<vmem>>, vector<1x1x16xf32>
    tpu.vector_store %arg5[%c0_17, %c7_18, %c0_19], %71 {strides = array<i32>} : memref<1x8x16xf32, #tpu.memory_space<vmem>>, vector<1x1x16xf32>,
    return
  }
  func.func @transform_0(%arg0: i32, %arg1: i32) -> (i32, i32, i32) {
    %c1_i32 = arith.constant 1 : i32
    %0 = arith.muli %arg1, %c1_i32 : i32
    %c1_i32_0 = arith.constant 1 : i32
    %1 = arith.subi %0, %c1_i32_0 : i32
    %c0_i32 = arith.constant 0 : i32
    %2 = arith.maxsi %1, %c0_i32 : i32
    %c0_i32_1 = arith.constant 0 : i32
    %c0_i32_2 = arith.constant 0 : i32
    return %arg0, %2, %c0_i32_1 : i32, i32, i32
  }
  func.func @transform_1(%arg0: i32, %arg1: i32) -> (i32, i32, i32) {
    %c0_i32 = arith.constant 0 : i32
    %c0_i32_0 = arith.constant 0 : i32
    return %arg0, %arg1, %c0_i32 : i32, i32, i32
  }
  func.func @transform_2(%arg0: i32, %arg1: i32) -> (i32, i32, i32) {
    %c1_i32 = arith.constant 1 : i32
    %0 = arith.addi %arg1, %c1_i32 : i32
    %c1_i32_0 = arith.constant 1 : i32
    %1 = arith.muli %0, %c1_i32_0 : i32
    %c1_i32_1 = arith.constant 1 : i32
    %2 = arith.minsi %1, %c1_i32_1 : i32
    %c0_i32 = arith.constant 0 : i32
    %c0_i32_2 = arith.constant 0 : i32
    return %arg0, %2, %c0_i32 : i32, i32, i32
  }
  func.func @transform_3(%arg0: i32, %arg1: i32) -> (i32, i32, i32) {
    %c0_i32 = arith.constant 0 : i32
    %c0_i32_0 = arith.constant 0 : i32
    return %arg0, %arg1, %c0_i32 : i32, i32, i32
  }
}

</mosaic_0001>

<llo_original>
// kernel: tpu_custom_call.1
$region0: #{tpu_custom_call.1}
  #allocation0 [shape = 'u32[]', space=smem, size = 0x4, offset = 0x4, fixed_abs, tag = 'smem constant byte address 0x4 - core index']
  #allocation1 [shape = 'u32[144,128]{1,0:T(1,128)}', space=vmem, size = 0x12000, scoped, tag = 'internal scratch']
  %s0 = inlined_call_operand.hbm [shape: f32[2,16,16], index: 0, kind: input, shape index: {}]
  %s1 = inlined_call_operand.hbm [shape: f32[2,16,16], index: 1, kind: input, shape index: {}]
  %s2 = inlined_call_operand.hbm [shape: f32[2,16,16], index: 2, kind: input, shape index: {}]
  %s3 = inlined_call_operand.hbm [shape: f32[2,16,16], index: 3, kind: output, shape index: {}]
  %s4 = sld [smem:[#allocation0]]
  $region57: #{tpu_custom_call.1} parent=0
    _
  %s6 = ssub.s32 1, %s4
  %s7 = scalar_select 0, %s6, %s4
  $region1: #{tpu_custom_call.1} parent=0
    #allocation2 [shape = 'u8[8192]{0}', space=vmem, size = 0x2000, scoped, tag = 'input window, operand 0']
    #allocation3 [shape = 's32[2]{0}', space=sflag, size = 0x8, scoped, tag = 'scoped memory for tpu_custom_call.1']
    #allocation4 [shape = 's32[2]{0}', space=sflag, size = 0x8, scoped, tag = 'scoped memory for tpu_custom_call.1']
    #allocation5 [shape = 'u8[8192]{0}', space=vmem, size = 0x2000, scoped, tag = 'input window, operand 1']
    #allocation6 [shape = 's32[2]{0}', space=sflag, size = 0x8, scoped, tag = 'scoped memory for tpu_custom_call.1']
    #allocation7 [shape = 'u8[8192]{0}', space=vmem, size = 0x2000, scoped, tag = 'input window, operand 2']
    #allocation8 [shape = 'u8[8192]{0}', space=vmem, size = 0x2000, scoped, tag = 'output window, operand 0']
    %8 = vsyncpa [#allocation3], 0
    %s9 = scalar_lea.sflag [#allocation3], 1
    %10 = vsyncpa %s9, 0
    %11 = vsyncpa [#allocation6], 0
    %s12 = scalar_lea.sflag [#allocation6], 1
    %13 = vsyncpa %s12, 0
    %14 = vsyncpa [#allocation4], 0
    %s15 = scalar_lea.sflag [#allocation4], 1
    %16 = vsyncpa %s15, 0
    loop: start=0, step=1, limit=6
    $region2: #{tpu_custom_call.1} parent=1 // loop_pre_header
      _
    $region3: #{tpu_custom_call.1} parent=1 // loop_header
      %s18 = sphi 0, %s22
      %p19 = scmp.ge.s32.totalorder %s18, 6
      %s25 = sphi 0, %s37
      %s26 = sphi 0, %s33
      %s27 = sphi 0, %s25
      %s28 = sphi 0, %s26
      %s29 = sphi 0, %s27
      %s30 = sphi 0, %s28
      %s48 = sphi 0, %s50
      %s51 = sphi 0, %s48
      %s52 = sphi 0, %s51
      %s68 = sphi 0, %s52
      %s76 = sphi 0, %s78
      %s79 = sphi 0, %s76
      %s80 = sphi 0, %s79
      %s96 = sphi 0, %s80
      %s110 = sphi 0, %s112
      %s113 = sphi 0, %s110
      %s114 = sphi 0, %s113
      %s130 = sphi 0, %s114
      %s138 = sphi 0, %s140
      %s141 = sphi 0, %s138
      %s142 = sphi 0, %s141
      %s158 = sphi 0, %s142
    $region4: #{tpu_custom_call.1} parent=1 // loop_header_branch
      %21 = sbr.rel (%p19) target = $region8
    $region5: #{tpu_custom_call.1} parent=1 // loop_body
      %s23 = ssub.s32 %s18, 1
      %s24 = ssub.s32 %s18, 2
      %s31 = sadd.s32 1, %s26
      %p32 = scmp.ge.s32.totalorder %s31, 2
      %s33 = scalar_select %p32, 0, %s31
      %s34 = sadd.s32 1, %s25
      %s35 = scalar_select %p32, %s34, %s25
      %p36 = scmp.ge.s32.totalorder %s35, 2
      %s37 = scalar_select %p36, 0, %s35
      %s38 = ssub.s32 %s26, 1
      %p39 = scmp.gt.s32.totalorder %s38, 0
      %s40 = scalar_select %p39, %s38, 0
      %s41 = ssub.s32 %s33, 1
      %p42 = scmp.gt.s32.totalorder %s41, 0
      %s43 = scalar_select %p42, %s41, 0
      %s44 = ssub.s32 %s25, %s37
      %s45 = ssub.s32 %s40, %s43
      %s46 = sor.u32 %s44, %s45
      %p47 = scmp.eq.s32.totalorder %s46, 0
      %s49 = sadd.s32 %s48, 1
      %s50 = scalar_select %p47, %s48, %s49
      %p53 = pneg %p47
      %p54 = scmp.eq.s32.totalorder %s18, 3
      %p55 = por %p53, %p54
      %p56 = scmp.ne.s32.totalorder %s48, %s51
      %p57 = scmp.eq.s32.totalorder %s18, 0
      %p58 = por %p56, %p57
      %p59 = scmp.ne.s32.totalorder %s48, %s51
      %p60 = scmp.eq.s32.totalorder %s23, 3
      %p61 = por %p59, %p60
      %p62 = scmp.ne.s32.totalorder %s51, %s52
      %p63 = scmp.eq.s32.totalorder %s23, 0
      %p64 = por %p62, %p63
      %p65 = scmp.ne.s32.totalorder %s51, %s52
      %p66 = scmp.eq.s32.totalorder %s24, 3
      %p67 = por %p65, %p66
      %p69 = scmp.ne.s32.totalorder %s52, %s68
      %p70 = scmp.eq.s32.totalorder %s24, 0
      %p71 = por %p69, %p70
      %s72 = ssub.s32 %s25, %s37
      %s73 = ssub.s32 %s26, %s33
      %s74 = sor.u32 %s72, %s73
      %p75 = scmp.eq.s32.totalorder %s74, 0
      %s77 = sadd.s32 %s76, 1
      %s78 = scalar_select %p75, %s76, %s77
      %p81 = pneg %p75
      %p82 = scmp.eq.s32.totalorder %s18, 3
      %p83 = por %p81, %p82
      %p84 = scmp.ne.s32.totalorder %s76, %s79
      %p85 = scmp.eq.s32.totalorder %s18, 0
      %p86 = por %p84, %p85
      %p87 = scmp.ne.s32.totalorder %s76, %s79
      %p88 = scmp.eq.s32.totalorder %s23, 3
      %p89 = por %p87, %p88
      %p90 = scmp.ne.s32.totalorder %s79, %s80
      %p91 = scmp.eq.s32.totalorder %s23, 0
      %p92 = por %p90, %p91
      %p93 = scmp.ne.s32.totalorder %s79, %s80
      %p94 = scmp.eq.s32.totalorder %s24, 3
      %p95 = por %p93, %p94
      %p97 = scmp.ne.s32.totalorder %s80, %s96
      %p98 = scmp.eq.s32.totalorder %s24, 0
      %p99 = por %p97, %p98
      %s100 = sadd.s32 %s26, 1
      %p101 = scmp.lt.s32.totalorder %s100, 1
      %s102 = scalar_select %p101, %s100, 1
      %s103 = sadd.s32 %s33, 1
      %p104 = scmp.lt.s32.totalorder %s103, 1
      %s105 = scalar_select %p104, %s103, 1
      %s106 = ssub.s32 %s25, %s37
      %s107 = ssub.s32 %s102, %s105
      %s108 = sor.u32 %s106, %s107
      %p109 = scmp.eq.s32.totalorder %s108, 0
      %s111 = sadd.s32 %s110, 1
      %s112 = scalar_select %p109, %s110, %s111
      %p115 = pneg %p109
      %p116 = scmp.eq.s32.totalorder %s18, 3
      %p117 = por %p115, %p116
      %p118 = scmp.ne.s32.totalorder %s110, %s113
      %p119 = scmp.eq.s32.totalorder %s18, 0
      %p120 = por %p118, %p119
      %p121 = scmp.ne.s32.totalorder %s110, %s113
      %p122 = scmp.eq.s32.totalorder %s23, 3
      %p123 = por %p121, %p122
      %p124 = scmp.ne.s32.totalorder %s113, %s114
      %p125 = scmp.eq.s32.totalorder %s23, 0
      %p126 = por %p124, %p125
      %p127 = scmp.ne.s32.totalorder %s113, %s114
      %p128 = scmp.eq.s32.totalorder %s24, 3
      %p129 = por %p127, %p128
      %p131 = scmp.ne.s32.totalorder %s114, %s130
      %p132 = scmp.eq.s32.totalorder %s24, 0
      %p133 = por %p131, %p132
      %s134 = ssub.s32 %s25, %s37
      %s135 = ssub.s32 %s26, %s33
      %s136 = sor.u32 %s134, %s135
      %p137 = scmp.eq.s32.totalorder %s136, 0
      %s139 = sadd.s32 %s138, 1
      %s140 = scalar_select %p137, %s138, %s139
      %p143 = pneg %p137
      %p144 = scmp.eq.s32.totalorder %s18, 3
      %p145 = por %p143, %p144
      %p146 = scmp.ne.s32.totalorder %s138, %s141
      %p147 = scmp.eq.s32.totalorder %s18, 0
      %p148 = por %p146, %p147
      %p149 = scmp.ne.s32.totalorder %s138, %s141
      %p150 = scmp.eq.s32.totalorder %s23, 3
      %p151 = por %p149, %p150
      %p152 = scmp.ne.s32.totalorder %s141, %s142
      %p153 = scmp.eq.s32.totalorder %s23, 0
      %p154 = por %p152, %p153
      %p155 = scmp.ne.s32.totalorder %s141, %s142
      %p156 = scmp.eq.s32.totalorder %s24, 3
      %p157 = por %p155, %p156
      %p159 = scmp.ne.s32.totalorder %s142, %s158
      %p160 = scmp.eq.s32.totalorder %s24, 0
      %p161 = por %p159, %p160
      %p162 = scmp.le.s32.totalorder 1, %s18
      %p163 = scmp.lt.s32.totalorder %s18, 5
      %p164 = pnand %p162, %p163
      %p165 = pneg %p164
      // Predicated region
      $region9: #{tpu_custom_call.1} parent=5 // pred_check
        _
      $region10: #{tpu_custom_call.1} parent=5 // pred_check_branch
        %167 = sbr.rel (%p164) target = $region12
      $region11: #{tpu_custom_call.1} parent=5 // pred_region
        %s168 = ssub.s32 %s18, 1
      $region12: #{tpu_custom_call.1} parent=5 // pred_fallthru
        _
      %p169 = scmp.lt.s32.totalorder %s18, 4
      // Predicated region
      $region13: #{tpu_custom_call.1} parent=5 // pred_check
        %p170 = pneg %p169
      $region14: #{tpu_custom_call.1} parent=5 // pred_check_branch
        %172 = sbr.rel (%p170) target = $region16
      $region15: #{tpu_custom_call.1} parent=5 // pred_region
        // Predicated region
        $region17: #{tpu_custom_call.1} parent=15 // pred_check
          %p173 = pneg %p58
        $region18: #{tpu_custom_call.1} parent=15 // pred_check_branch
          %175 = sbr.rel (%p173) target = $region20
        $region19: #{tpu_custom_call.1} parent=15 // pred_region
          %s176 = sand.u32 %s48, 1
          %s177 = scalar_lea.sflag [#allocation3], %s176
          %s178 = sand.u32 %s48, 1
          %s179 = smul.addr %s178, 8
          %s180 = scalar_lea.vmem [#allocation2], %s179
          %s181 = ssub.s32 %s26, 1
          %p182 = scmp.gt.s32.totalorder %s181, 0
          %s183 = scalar_select %p182, %s181, 0
          %s185 = ssub.s32 128, 128
          %186 = vsyncadd %s177, %s185
          %s187 = smul.addr %s25, 2
          %s188 = sadd.s32 %s183, %s187
          %s189 = smul.addr %s188, 128
          %s190 = scalar_lea.hbm %s0, %s189
          %s192 = sshll.u32 %s180, 4
          %s193 = int_to_ptr.vmem [resolvable:$true] %s192
          %195 = dma.hbm_to_vmem [thread:$0]  %s190, 128, %s193, %s177
        $region20: #{tpu_custom_call.1} parent=15 // pred_fallthru
          _
        // Predicated region
        $region21: #{tpu_custom_call.1} parent=15 // pred_check
          %p196 = pneg %p86
        $region22: #{tpu_custom_call.1} parent=15 // pred_check_branch
          %198 = sbr.rel (%p196) target = $region24
        $region23: #{tpu_custom_call.1} parent=15 // pred_region
          %s199 = sand.u32 %s18, 1
          %s200 = scalar_lea.sflag [#allocation6], %s199
          %s201 = sand.u32 %s76, 1
          %s202 = smul.addr %s201, 8
          %s203 = scalar_lea.vmem [#allocation5], %s202
          %s205 = ssub.s32 128, 128
          %206 = vsyncadd %s200, %s205
          %s207 = smul.addr %s25, 2
          %s208 = sadd.s32 %s26, %s207
          %s209 = smul.addr %s208, 128
          %s210 = scalar_lea.hbm %s1, %s209
          %s212 = sshll.u32 %s203, 4
          %s213 = int_to_ptr.vmem [resolvable:$true] %s212
          %215 = dma.hbm_to_vmem [thread:$0]  %s210, 128, %s213, %s200
        $region24: #{tpu_custom_call.1} parent=15 // pred_fallthru
          _
        // Predicated region
        $region25: #{tpu_custom_call.1} parent=15 // pred_check
          %p216 = pneg %p120
        $region26: #{tpu_custom_call.1} parent=15 // pred_check_branch
          %218 = sbr.rel (%p216) target = $region28
        $region27: #{tpu_custom_call.1} parent=15 // pred_region
          %s219 = sand.u32 %s18, 1
          %s220 = scalar_lea.sflag [#allocation6], %s219
          %s221 = sand.u32 %s110, 1
          %s222 = smul.addr %s221, 8
          %s223 = scalar_lea.vmem [#allocation7], %s222
          %s224 = sadd.s32 %s26, 1
          %p225 = scmp.lt.s32.totalorder %s224, 1
          %s226 = scalar_select %p225, %s224, 1
          %s228 = ssub.s32 128, 128
          %229 = vsyncadd %s220, %s228
          %s230 = smul.addr %s25, 2
          %s231 = sadd.s32 %s226, %s230
          %s232 = smul.addr %s231, 128
          %s233 = scalar_lea.hbm %s2, %s232
          %s235 = sshll.u32 %s223, 4
          %s236 = int_to_ptr.vmem [resolvable:$true] %s235
          %238 = dma.hbm_to_vmem [thread:$0]  %s233, 128, %s236, %s220
        $region28: #{tpu_custom_call.1} parent=15 // pred_fallthru
          _
      $region16: #{tpu_custom_call.1} parent=5 // pred_fallthru
        _
      %p239 = scmp.le.s32.totalorder 1, %s18
      %p240 = scmp.lt.s32.totalorder %s18, 5
      %p241 = pnand %p239, %p240
      %p242 = pneg %p241
      // Predicated region
      $region29: #{tpu_custom_call.1} parent=5 // pred_check
        _
      $region30: #{tpu_custom_call.1} parent=5 // pred_check_branch
        %244 = sbr.rel (%p241) target = $region32
      $region31: #{tpu_custom_call.1} parent=5 // pred_region
        %s245 = ssub.s32 %s18, 1
        %s246 = sand.u32 %s51, 1
        %s247 = scalar_lea.sflag [#allocation3], %s246
        %s248 = sand.u32 %s51, 1
        %s249 = smul.addr %s248, 8
        %s250 = scalar_lea.vmem [#allocation2], %s249
        // Predicated region
        $region33: #{tpu_custom_call.1} parent=31 // pred_check
          %p251 = pneg %p64
        $region34: #{tpu_custom_call.1} parent=31 // pred_check_branch
          %253 = sbr.rel (%p251) target = $region36
        $region35: #{tpu_custom_call.1} parent=31 // pred_region
          %254 = dma.done %s247, 128
        $region36: #{tpu_custom_call.1} parent=31 // pred_fallthru
          _
        %s255 = sand.u32 %s23, 1
        %s256 = scalar_lea.sflag [#allocation6], %s255
        %s257 = sand.u32 %s79, 1
        %s258 = smul.addr %s257, 8
        %s259 = scalar_lea.vmem [#allocation5], %s258
        // Predicated region
        $region37: #{tpu_custom_call.1} parent=31 // pred_check
          %p260 = pneg %p92
        $region38: #{tpu_custom_call.1} parent=31 // pred_check_branch
          %262 = sbr.rel (%p260) target = $region40
        $region39: #{tpu_custom_call.1} parent=31 // pred_region
          %263 = dma.done %s256, 128
        $region40: #{tpu_custom_call.1} parent=31 // pred_fallthru
          _
        %s264 = sand.u32 %s23, 1
        %s265 = scalar_lea.sflag [#allocation6], %s264
        %s266 = sand.u32 %s113, 1
        %s267 = smul.addr %s266, 8
        %s268 = scalar_lea.vmem [#allocation7], %s267
        // Predicated region
        $region41: #{tpu_custom_call.1} parent=31 // pred_check
          %p269 = pneg %p126
        $region42: #{tpu_custom_call.1} parent=31 // pred_check_branch
          %271 = sbr.rel (%p269) target = $region44
        $region43: #{tpu_custom_call.1} parent=31 // pred_region
          %272 = dma.done %s265, 128
        $region44: #{tpu_custom_call.1} parent=31 // pred_fallthru
          _
        %s273 = sand.u32 %s51, 1
        %s274 = scalar_lea.sflag [#allocation3], %s273
        %s275 = sand.u32 %s51, 1
        %s276 = smul.addr %s275, 8
        %s277 = scalar_lea.vmem [#allocation2], %s276
        %p278 = pneg %p64
        %p279 = pneg %p61
        %s280 = sand.u32 %s23, 1
        %s281 = scalar_lea.sflag [#allocation6], %s280
        %s282 = sand.u32 %s79, 1
        %s283 = smul.addr %s282, 8
        %s284 = scalar_lea.vmem [#allocation5], %s283
        %p285 = pneg %p92
        %p286 = pneg %p89
        %s287 = sand.u32 %s23, 1
        %s288 = scalar_lea.sflag [#allocation6], %s287
        %s289 = sand.u32 %s113, 1
        %s290 = smul.addr %s289, 8
        %s291 = scalar_lea.vmem [#allocation7], %s290
        %p292 = pneg %p126
        %p293 = pneg %p123
        %p294 = pneg %p154
        %p295 = pneg %p151
        %s296 = sand.u32 %s141, 1
        %s297 = scalar_lea.sflag [#allocation4], %s296
        %s298 = sand.u32 %s141, 1
        %s299 = smul.addr %s298, 8
        %s300 = scalar_lea.vmem [#allocation8], %s299
        %s301 = ssub.s32 %s28, 1
        %p302 = scmp.gt.s32.totalorder %s301, 0
        %s303 = scalar_select %p302, %s301, 0
        %s304 = sadd.s32 %s28, 1
        %p305 = scmp.lt.s32.totalorder %s304, 1
        %s306 = scalar_select %p305, %s304, 1
        %s307 = smul.u32 %s28, 8
        %v308 = vld [vmem:[%s259] sm:$0xff]
        %v309 = vld [vmem:[%s250 + $0x7] sm:$0x1]
        %v310 = vld [vmem:[%s268] sm:$0x1]
        %p311 = scmp.gt.s32.totalorder %s28, 0
        %s312 = scalar_select %p311, 1, 0
        %v313 = vstv %s312
        %vm314 = vcmp.eq.s32.totalorder %v313, 1
        %v315 = vsel %vm314, %v309, 0.0
        %s316 = sadd.s32 %s307, 8
        %p317 = scmp.lt.s32.totalorder %s316, 16
        %s318 = scalar_select %p317, 1, 0
        %v319 = vstv %s318
        %vm320 = vcmp.eq.s32.totalorder %v319, 1
        %v321 = vsel %vm320, %v310, 0.0
        %323 = vrot.lane.b32.xlu0 %v308, 1
        %v324 = vpop.permute.xlu0 %323
        %vm326 = vcmask 7168
        %v327 = vsel %vm326, 0.0, %v324
        %vm328 = vcmask 138240
        %v329 = vsel %vm328, %v327, 0.0
        %v330 = vadd.f32 %v308, %v308
        %v331 = vadd.f32 %v329, %v330
        %333 = vrot.lane.b32.xlu0 %v329, 126
        %v334 = vpop.permute.xlu0 %333
        %v336 = vadd.f32 %v331, %v334
        %v337 = vsub.f32 %v329, %v334
        %339 = vrot.lane.b32.xlu0 %v315, 1
        %v340 = vpop.permute.xlu0 %339
        %v342 = vsel %vm326, 0.0, %v340
        %v343 = vsel %vm328, %v342, 0.0
        %v344 = vadd.f32 %v315, %v315
        %v345 = vadd.f32 %v343, %v344
        %347 = vrot.lane.b32.xlu0 %v343, 126
        %v348 = vpop.permute.xlu0 %347
        %v350 = vadd.f32 %v345, %v348
        %v351 = vsub.f32 %v343, %v348
        %353 = vrot.lane.b32.xlu0 %v321, 1
        %v354 = vpop.permute.xlu0 %353
        %v356 = vsel %vm326, 0.0, %v354
        %v357 = vsel %vm328, %v356, 0.0
        %v358 = vadd.f32 %v321, %v321
        %v359 = vadd.f32 %v357, %v358
        %361 = vrot.lane.b32.xlu0 %v357, 126
        %v362 = vpop.permute.xlu0 %361
        %v364 = vadd.f32 %v359, %v362
        %v365 = vsub.f32 %v357, %v362
        %v367 = vrot.slane %v336, 2
        %v369 = vsub.f32 %v336, %v367
        %v370 = vadd.f32 %v337, %v337
        %v372 = vrot.slane %v370, 1
        %v374 = vadd.f32 %v337, %v372
        %v376 = vrot.slane %v337, 2
        %v378 = vadd.f32 %v374, %v376
        %v379 = vmul.f32 %v369, %v369
        %v380 = vmul.f32 %v378, %v378
        %v381 = vadd.f32 %v379, %v380
        %v382 = vrsqrt.pop %v381
        %v383 = vmul.f32 %v381, %v382
        %vm384 = vcmp.eq.f32.partialorder %v381, inf
        %v385 = vsel %vm384, %v381, %v383
        %vm386 = vcmp.eq.f32.partialorder %v381, 0.0
        %v387 = vand.u32 %v381, 2147483648
        %v388 = vsel %vm386, %v387, %v385
        %vm389 = vcmask 128000
        %390 = vst.msk [vmem:[%s300 + $0x1] sm:$0x3f] %vm389, %v388
        %v391 = vrot.slane %v336, 1
        %v393 = vsub.f32 %v350, %v391
        %v394 = vadd.f32 %v351, %v370
        %v395 = vrot.slane %v337, 1
        %v397 = vadd.f32 %v394, %v395
        %v398 = vmul.f32 %v393, %v393
        %v399 = vmul.f32 %v397, %v397
        %v400 = vadd.f32 %v398, %v399
        %v401 = vrsqrt.pop %v400
        %v402 = vmul.f32 %v400, %v401
        %vm403 = vcmp.eq.f32.partialorder %v400, inf
        %v404 = vsel %vm403, %v400, %v402
        %vm405 = vcmp.eq.f32.partialorder %v400, 0.0
        %v406 = vand.u32 %v400, 2147483648
        %v407 = vsel %vm405, %v406, %v404
        %vm408 = vcmask 122880
        %409 = vst.msk [vmem:[%s300] sm:$0x1] %vm408, %v407
        %v411 = vrot.slane %v364, 2
        %v413 = vsub.f32 %v336, %v411
        %v415 = vrot.slane %v365, 2
        %v417 = vadd.f32 %v374, %v415
        %v418 = vmul.f32 %v413, %v413
        %v419 = vmul.f32 %v417, %v417
        %v420 = vadd.f32 %v418, %v419
        %v421 = vrsqrt.pop %v420
        %v422 = vmul.f32 %v420, %v421
        %vm423 = vcmp.eq.f32.partialorder %v420, inf
        %v424 = vsel %vm423, %v420, %v422
        %vm425 = vcmp.eq.f32.partialorder %v420, 0.0
        %v426 = vand.u32 %v420, 2147483648
        %v427 = vsel %vm425, %v426, %v424
        %vm428 = vcmask 129030
        %429 = vst.msk [vmem:[%s300 + $0x1] sm:$0x40] %vm428, %v427
        %s430 = sand.u32 %s141, 1
        %s431 = scalar_lea.sflag [#allocation4], %s430
        %s432 = sand.u32 %s141, 1
        %s433 = smul.addr %s432, 8
        %s434 = scalar_lea.vmem [#allocation8], %s433
        // Predicated region
        $region45: #{tpu_custom_call.1} parent=31 // pred_check
          %p435 = pneg %p151
        $region46: #{tpu_custom_call.1} parent=31 // pred_check_branch
          %437 = sbr.rel (%p435) target = $region48
        $region47: #{tpu_custom_call.1} parent=31 // pred_region
          %s439 = ssub.s32 128, 128
          %440 = vsyncadd %s431, %s439
          %s441 = smul.addr %s27, 2
          %s442 = sadd.s32 %s28, %s441
          %s443 = smul.addr %s442, 128
          %s444 = scalar_lea.hbm %s3, %s443
          %s446 = sshll.u32 %s434, 4
          %s447 = int_to_ptr.vmem [resolvable:$true] %s446
          %449 = dma.vmem_to_hbm [thread:$0]  %s447, 128, %s444, %s431
        $region48: #{tpu_custom_call.1} parent=31 // pred_fallthru
          _
      $region32: #{tpu_custom_call.1} parent=5 // pred_fallthru
        _
      %p450 = scmp.le.s32.totalorder 2, %s18
      // Predicated region
      $region49: #{tpu_custom_call.1} parent=5 // pred_check
        %p451 = pneg %p450
      $region50: #{tpu_custom_call.1} parent=5 // pred_check_branch
        %453 = sbr.rel (%p451) target = $region52
      $region51: #{tpu_custom_call.1} parent=5 // pred_region
        %s454 = ssub.s32 %s18, 2
        // Predicated region
        $region53: #{tpu_custom_call.1} parent=51 // pred_check
          %p455 = pneg %p157
        $region54: #{tpu_custom_call.1} parent=51 // pred_check_branch
          %457 = sbr.rel (%p455) target = $region56
        $region55: #{tpu_custom_call.1} parent=51 // pred_region
          %s458 = sand.u32 %s142, 1
          %s459 = scalar_lea.sflag [#allocation4], %s458
          %s460 = sand.u32 %s142, 1
          %s461 = smul.addr %s460, 8
          %s462 = scalar_lea.vmem [#allocation8], %s461
          %463 = dma.done %s459, 128
        $region56: #{tpu_custom_call.1} parent=51 // pred_fallthru
          _
      $region52: #{tpu_custom_call.1} parent=5 // pred_fallthru
        _
    $region6: #{tpu_custom_call.1} parent=1 // loop_footer
      %s22 = sadd.s32 1, %s18
    $region7: #{tpu_custom_call.1} parent=1 // loop_footer_branch
      %17 = sbr.rel target = $region3
    $region8: #{tpu_custom_call.1} parent=1 // loop_exit
      _
    %464 = vsyncpa [#allocation3], 1
    %s465 = scalar_lea.sflag [#allocation3], 1
    %466 = vsyncpa %s465, 1
    %467 = vsyncpa [#allocation6], 1
    %s468 = scalar_lea.sflag [#allocation6], 1
    %469 = vsyncpa %s468, 1
    %470 = vsyncpa [#allocation4], 1
    %s471 = scalar_lea.sflag [#allocation4], 1
    %472 = vsyncpa %s471, 1

</llo_original>
